<compile_context>
chip_gen: v7x
topology: tpu7x:2x2x1
jax: 0.10.0
libtpu: 0.0.40
codegen_flags: <defaults>
</compile_context>

<pallas_src>
import jax
import jax.numpy as jnp
from jax.experimental import pallas as pl
from jax.experimental.pallas import tpu as pltpu

LANE = 128  # TPU vreg lane width


def _round_up(n, m):
    return ((n + m - 1) // m) * m


# --------------------------------------------------------------------------
# Kernel
# --------------------------------------------------------------------------
def policy_mlp_kernel(x_ref, w1_ref, b1_ref, w2_ref, b2_ref, w3_ref, b3_ref,
                      out_ref):
    """Fused 3-layer MLP on one (block_rows, 128) tile of the batch.

    Matmuls run on the MXU with bf16 operands + f32 accumulation; bias add and
    ReLU run on the VPU in f32.  Weights/biases are fully VMEM-resident.
    """
    # f32 -> bf16 pack on the VPU (hidden under the MXU work of layer 1).
    x = x_ref[...].astype(w1_ref.dtype)                  # (tm, 128) bf16

    # Layer 1: Linear + ReLU
    h1 = jnp.dot(x, w1_ref[...], preferred_element_type=jnp.float32)
    h1 = jnp.maximum(h1 + b1_ref[...], 0.0)

    # Layer 2: Linear + ReLU
    h2 = jnp.dot(h1.astype(w2_ref.dtype), w2_ref[...],
                 preferred_element_type=jnp.float32)
    h2 = jnp.maximum(h2 + b2_ref[...], 0.0)

    # Layer 3: Linear (logits) -- lane-dense (tm, 128) bf16 store.
    logits = jnp.dot(h2.astype(w3_ref.dtype), w3_ref[...],
                     preferred_element_type=jnp.float32)
    out_ref[...] = (logits + b3_ref[...]).astype(out_ref.dtype)


# --------------------------------------------------------------------------
# One-time parameter preparation (hoisted out of the forward path)
# --------------------------------------------------------------------------
def prepare_params(params, *, mm_dtype=jnp.bfloat16):
    """Pad/cast parameters once; reuse the result across forward calls."""
    w1, b1, w2, b2, w3, b3 = params
    state_dim, hidden_dim = w1.shape
    action_dim = w3.shape[1]

    sp = _round_up(state_dim, LANE)    # padded state width (lane-dense x tile)
    hp = _round_up(hidden_dim, LANE)   # padded hidden width (keep at 128)
    ap = _round_up(action_dim, LANE)   # padded (lane-dense) output width

    w1p = jnp.zeros((sp, hp), mm_dtype).at[:state_dim, :hidden_dim].set(
        w1.astype(mm_dtype))
    b1p = jnp.zeros((1, hp), jnp.float32).at[:, :hidden_dim].set(
        b1.reshape(1, -1))
    w2p = jnp.zeros((hp, hp), mm_dtype).at[:hidden_dim, :hidden_dim].set(
        w2.astype(mm_dtype))
    b2p = jnp.zeros((1, hp), jnp.float32).at[:, :hidden_dim].set(
        b2.reshape(1, -1))
    w3p = jnp.zeros((hp, ap), mm_dtype).at[:hidden_dim, :action_dim].set(
        w3.astype(mm_dtype))
    b3p = jnp.zeros((1, ap), jnp.float32).at[:, :action_dim].set(
        b3.reshape(1, -1))

    return {
        "tensors": (w1p, b1p, w2p, b2p, w3p, b3p),
        "state_dim": state_dim,
        "action_dim": action_dim,
        "sp": sp,
        "ap": ap,
    }


# --------------------------------------------------------------------------
# Forward wrapper
# --------------------------------------------------------------------------
def policy_forward(x, prepped, *, block_rows=512, return_padded=False):
    """Run the fused MLP over the whole batch in one gridded pallas_call.

    x: (batch, state_dim) float32.
    Returns (batch, action_dim) float32 (or the padded bf16 buffer if
    return_padded=True, so a downstream consumer can fuse the slice).
    """
    w1p, b1p, w2p, b2p, w3p, b3p = prepped["tensors"]
    state_dim = prepped["state_dim"]
    action_dim = prepped["action_dim"]
    sp, ap = prepped["sp"], prepped["ap"]

    batch = x.shape[0]
    assert x.shape[1] == state_dim

    # Pick block_rows: big tiles amortize the ~0.35us/step cost, but keep the
    # grid length >= 2 (and balanced) so v7x's second TensorCore gets work.
    bp = _round_up(batch, 8)
    if bp >= 16:
        block_rows = min(block_rows, _round_up(pl.cdiv(bp, 2), 8))
    else:
        block_rows = bp
    bp = _round_up(bp, block_rows)
    grid = (bp // block_rows,)

    # Single pad pass over x: zero-pad batch rows + state columns, keep f32
    # (the bf16 cast happens inside the kernel).  Padded rows/cols are zero.
    xp = jnp.zeros((bp, sp), jnp.float32).at[:batch, :state_dim].set(x)

    # Weights / biases: full-extent blocks with a constant (0, 0) block index
    # -> kept VMEM-resident across the pipelined batch loop (Mosaic elides
    # re-copies for grid-invariant block indices).
    resident = lambda shape: pl.BlockSpec(shape, lambda i: (0, 0))

    out = pl.pallas_call(
        policy_mlp_kernel,
        out_shape=jax.ShapeDtypeStruct((bp, ap), jnp.bfloat16),
        grid=grid,
        in_specs=[
            pl.BlockSpec((block_rows, sp), lambda i: (i, 0)),   # x tile
            resident(w1p.shape), resident(b1p.shape),
            resident(w2p.shape), resident(b2p.shape),
            resident(w3p.shape), resident(b3p.shape),
        ],
        out_specs=pl.BlockSpec((block_rows, ap), lambda i: (i, 0)),
        compiler_params=pltpu.CompilerParams(
            # Batch-block axis is independent -> shard across v7x's 2 TCs.
            dimension_semantics=("parallel",),
        ),
    )(xp, w1p, b1p, w2p, b2p, w3p, b3p)

    if return_padded:
        return out
    return out[:batch, :action_dim].astype(jnp.float32)


# --------------------------------------------------------------------------
# Init + pure-JAX reference
# --------------------------------------------------------------------------
def init_params(key, state_dim, action_dim, hidden_dim):
    """Kaiming-uniform-ish init like torch Linear defaults.
    Weights stored as (in_features, out_features); biases as (out_features,)."""
    ks = jax.random.split(key, 6)

    def linear_init(kw, kb, fan_in, fan_out):
        bound = 1.0 / jnp.sqrt(fan_in)
        w = jax.random.uniform(kw, (fan_in, fan_out), jnp.float32, -bound, bound)
        b = jax.random.uniform(kb, (fan_out,), jnp.float32, -bound, bound)
        return w, b

    w1, b1 = linear_init(ks[0], ks[1], state_dim, hidden_dim)
    w2, b2 = linear_init(ks[2], ks[3], hidden_dim, hidden_dim)
    w3, b3 = linear_init(ks[4], ks[5], hidden_dim, action_dim)
    return w1, b1, w2, b2, w3, b3


def reference_forward(x, params, *, use_bf16_matmul=True):
    """Pure-JAX reference, optionally mirroring the bf16-operand matmuls."""
    w1, b1, w2, b2, w3, b3 = params
    dt = jnp.bfloat16 if use_bf16_matmul else jnp.float32

    def lin(a, w, b):
        return jnp.dot(a.astype(dt), w.astype(dt),
                       preferred_element_type=jnp.float32) + b

    h1 = jnp.maximum(lin(x, w1, b1), 0.0)
    h2 = jnp.maximum(lin(h1, w2, b2), 0.0)
    return lin(h2, w3, b3)


# --------------------------------------------------------------------------
if __name__ == "__main__":
    # Small shapes consistent with the module: CartPole-like policy.
    state_dim, action_dim, hidden_dim = 4, 2, 64
    # Meta-batch of tasks x trajectory steps folded into one gridded call;
    # deliberately not a multiple of 8 to exercise batch padding (grid = 2).
    batch = 200

    key = jax.random.PRNGKey(0)
    kx, kp = jax.random.split(key)

    x = jax.random.normal(kx, (batch, state_dim), jnp.float32)
    params = init_params(kp, state_dim, action_dim, hidden_dim)

    # One-time parameter padding / bf16 cast (reused across forward calls).
    prepped = prepare_params(params)

    logits = jax.block_until_ready(policy_forward(x, prepped))

    # Sanity checks: vs bf16-operand reference (tight-ish; account for the
    # bf16 output store), and vs full-f32 reference (loose).
    ref_bf16 = reference_forward(x, params, use_bf16_matmul=True)
    ref_f32 = reference_forward(x, params, use_bf16_matmul=False)

    assert logits.shape == (batch, action_dim)
    assert jnp.allclose(logits, ref_bf16, atol=2e-2, rtol=2e-2), \
        "mismatch vs bf16-matmul reference"
    assert jnp.allclose(logits, ref_f32, atol=5e-2, rtol=5e-2), \
        "mismatch vs f32 reference"

    # TODO(synk): get_action's Categorical sampling / log_prob is host-side
    # stochastic control flow in the reference and is not part of forward().

    print("KERNEL_OK")
</pallas_src>

<mosaic_0001>
module attributes {stable_mosaic.version = 11 : i64} {
  func.func @policy_mlp_kernel(%arg0: i32, %arg1: memref<104x128xf32, #tpu.memory_space<vmem>>, %arg2: memref<128x128xbf16, #tpu.memory_space<vmem>>, %arg3: memref<1x128xf32, #tpu.memory_space<vmem>>, %arg4: memref<128x128xbf16, #tpu.memory_space<vmem>>, %arg5: memref<1x128xf32, #tpu.memory_space<vmem>>, %arg6: memref<128x128xbf16, #tpu.memory_space<vmem>>, %arg7: memref<1x128xf32, #tpu.memory_space<vmem>>, %arg8: memref<104x128xbf16, #tpu.memory_space<vmem>>) attributes {dimension_semantics = [#tpu.dimension_semantics<parallel>], iteration_bounds = array<i64: 2>, scalar_prefetch = 0 : i64, scratch_operands = 0 : i64, tpu.core_type = #tpu.core_type<tc>, window_params = [{transform_indices = @transform_0, window_bounds = array<i64: 104, 128>}, {pipeline_mode = #tpu.pipeline_mode<synchronous>, transform_indices = @transform_1, window_bounds = array<i64: 128, 128>}, {pipeline_mode = #tpu.pipeline_mode<synchronous>, transform_indices = @transform_2, window_bounds = array<i64: 1, 128>}, {pipeline_mode = #tpu.pipeline_mode<synchronous>, transform_indices = @transform_3, window_bounds = array<i64: 128, 128>}, {pipeline_mode = #tpu.pipeline_mode<synchronous>, transform_indices = @transform_4, window_bounds = array<i64: 1, 128>}, {pipeline_mode = #tpu.pipeline_mode<synchronous>, transform_indices = @transform_5, window_bounds = array<i64: 128, 128>}, {pipeline_mode = #tpu.pipeline_mode<synchronous>, transform_indices = @transform_6, window_bounds = array<i64: 1, 128>}, {transform_indices = @transform_7, window_bounds = array<i64: 104, 128>}]} {
    %c0 = arith.constant 0 : index
    %c0_0 = arith.constant 0 : index
    %0 = vector.load %arg1[%c0, %c0_0] : memref<104x128xf32, #tpu.memory_space<vmem>>, vector<104x128xf32>
    %1 = arith.truncf %0 : vector<104x128xf32> to vector<104x128xbf16>
    %c0_1 = arith.constant 0 : index
    %c0_2 = arith.constant 0 : index
    %2 = vector.load %arg2[%c0_1, %c0_2] : memref<128x128xbf16, #tpu.memory_space<vmem>>, vector<128x128xbf16>
    %cst = arith.constant dense<0.000000e+00> : vector<104x128xf32>
    %3 = tpu.matmul %1, %2, %cst {dimension_numbers = #tpu.dot_dimension_numbers<[1], [0], [0], [1], [0, 0, 1, 1], [], []>} : vector<104x128xbf16>, vector<128x128xbf16>, vector<104x128xf32> -> vector<104x128xf32>
    %c0_3 = arith.constant 0 : index
    %c0_4 = arith.constant 0 : index
    %4 = vector.load %arg3[%c0_3, %c0_4] : memref<1x128xf32, #tpu.memory_space<vmem>>, vector<1x128xf32>
    %5 = vector.broadcast %4 : vector<1x128xf32> to vector<104x128xf32>
    %6 = arith.addf %3, %5 : vector<104x128xf32>
    %cst_5 = arith.constant 0.000000e+00 : f32
    %7 = vector.broadcast %cst_5 : f32 to vector<104x128xf32>
    %8 = arith.maximumf %6, %7 : vector<104x128xf32>
    %9 = arith.truncf %8 : vector<104x128xf32> to vector<104x128xbf16>
    %c0_6 = arith.constant 0 : index
    %c0_7 = arith.constant 0 : index
    %10 = vector.load %arg4[%c0_6, %c0_7] : memref<128x128xbf16, #tpu.memory_space<vmem>>, vector<128x128xbf16>
    %cst_8 = arith.constant dense<0.000000e+00> : vector<104x128xf32>
    %11 = tpu.matmul %9, %10, %cst_8 {dimension_numbers = #tpu.dot_dimension_numbers<[1], [0], [0], [1], [0, 0, 1, 1], [], []>} : vector<104x128xbf16>, vector<128x128xbf16>, vector<104x128xf32> -> vector<104x128xf32>
    %c0_9 = arith.constant 0 : index
    %c0_10 = arith.constant 0 : index
    %12 = vector.load %arg5[%c0_9, %c0_10] : memref<1x128xf32, #tpu.memory_space<vmem>>, vector<1x128xf32>
    %13 = vector.broadcast %12 : vector<1x128xf32> to vector<104x128xf32>
    %14 = arith.addf %11, %13 : vector<104x128xf32>
    %cst_11 = arith.constant 0.000000e+00 : f32
    %15 = vector.broadcast %cst_11 : f32 to vector<104x128xf32>
    %16 = arith.maximumf %14, %15 : vector<104x128xf32>
    %17 = arith.truncf %16 : vector<104x128xf32> to vector<104x128xbf16>
    %c0_12 = arith.constant 0 : index
    %c0_13 = arith.constant 0 : index
    %18 = vector.load %arg6[%c0_12, %c0_13] : memref<128x128xbf16, #tpu.memory_space<vmem>>, vector<128x128xbf16>
    %cst_14 = arith.constant dense<0.000000e+00> : vector<104x128xf32>
    %19 = tpu.matmul %17, %18, %cst_14 {dimension_numbers = #tpu.dot_dimension_numbers<[1], [0], [0], [1], [0, 0, 1, 1], [], []>} : vector<104x128xbf16>, vector<128x128xbf16>, vector<104x128xf32> -> vector<104x128xf32>
    %c0_15 = arith.constant 0 : index
    %c0_16 = arith.constant 0 : index
    %20 = vector.load %arg7[%c0_15, %c0_16] : memref<1x128xf32, #tpu.memory_space<vmem>>, vector<1x128xf32>
    %21 = vector.broadcast %20 : vector<1x128xf32> to vector<104x128xf32>
    %22 = arith.addf %19, %21 : vector<104x128xf32>
    %23 = arith.truncf %22 : vector<104x128xf32> to vector<104x128xbf16>
    %c0_17 = arith.constant 0 : index
    %c0_18 = arith.constant 0 : index
    %24 = vector.load %arg8[%c0_17, %c0_18] : memref<104x128xbf16, #tpu.memory_space<vmem>>, vector<104x128xbf16>
    tpu.vector_store %arg8[%c0_17, %c0_18], %23 {strides = array<i32>} : memref<104x128xbf16, #tpu.memory_space<vmem>>, vector<104x128xbf16>,
    return
  }
  func.func @transform_0(%arg0: i32) -> (i32, i32) {
    %c0_i32 = arith.constant 0 : i32
    %c0_i32_0 = arith.constant 0 : i32
    return %arg0, %c0_i32 : i32, i32
  }
  func.func @transform_1(%arg0: i32) -> (i32, i32) {
    %c0_i32 = arith.constant 0 : i32
    %c0_i32_0 = arith.constant 0 : i32
    %c0_i32_1 = arith.constant 0 : i32
    return %c0_i32, %c0_i32_0 : i32, i32
  }
  func.func @transform_2(%arg0: i32) -> (i32, i32) {
    %c0_i32 = arith.constant 0 : i32
    %c0_i32_0 = arith.constant 0 : i32
    %c0_i32_1 = arith.constant 0 : i32
    return %c0_i32, %c0_i32_0 : i32, i32
  }
  func.func @transform_3(%arg0: i32) -> (i32, i32) {
    %c0_i32 = arith.constant 0 : i32
    %c0_i32_0 = arith.constant 0 : i32
    %c0_i32_1 = arith.constant 0 : i32
    return %c0_i32, %c0_i32_0 : i32, i32
  }
  func.func @transform_4(%arg0: i32) -> (i32, i32) {
    %c0_i32 = arith.constant 0 : i32
    %c0_i32_0 = arith.constant 0 : i32
    %c0_i32_1 = arith.constant 0 : i32
    return %c0_i32, %c0_i32_0 : i32, i32
  }
  func.func @transform_5(%arg0: i32) -> (i32, i32) {
    %c0_i32 = arith.constant 0 : i32
    %c0_i32_0 = arith.constant 0 : i32
    %c0_i32_1 = arith.constant 0 : i32
    return %c0_i32, %c0_i32_0 : i32, i32
  }
  func.func @transform_6(%arg0: i32) -> (i32, i32) {
    %c0_i32 = arith.constant 0 : i32
    %c0_i32_0 = arith.constant 0 : i32
    %c0_i32_1 = arith.constant 0 : i32
    return %c0_i32, %c0_i32_0 : i32, i32
  }
  func.func @transform_7(%arg0: i32) -> (i32, i32) {
    %c0_i32 = arith.constant 0 : i32
    %c0_i32_0 = arith.constant 0 : i32
    return %arg0, %c0_i32 : i32, i32
  }
}

</mosaic_0001>

<llo_original>
// kernel: tpu_custom_call.1
$region0: #{tpu_custom_call.1}
  #allocation0 [shape = 'u32[]', space=smem, size = 0x4, offset = 0x4, fixed_abs, tag = 'smem constant byte address 0x4 - core index']
  #allocation1 [shape = 'u32[144,128]{1,0:T(1,128)}', space=vmem, size = 0x12000, scoped, tag = 'internal scratch']
  %s0 = inlined_call_operand.hbm [shape: f32[208,128], index: 0, kind: input, shape index: {}]
  %s1 = inlined_call_operand.hbm [shape: bf16[128,128], index: 1, kind: input, shape index: {}]
  %s2 = inlined_call_operand.vmem [shape: f32[1,128], index: 2, kind: input, shape index: {}]
  %s3 = inlined_call_operand.hbm [shape: bf16[128,128], index: 3, kind: input, shape index: {}]
  %s4 = inlined_call_operand.vmem [shape: f32[1,128], index: 4, kind: input, shape index: {}]
  %s5 = inlined_call_operand.hbm [shape: bf16[128,128], index: 5, kind: input, shape index: {}]
  %s6 = inlined_call_operand.vmem [shape: f32[1,128], index: 6, kind: input, shape index: {}]
  %s7 = inlined_call_operand.hbm [shape: bf16[208,128], index: 7, kind: output, shape index: {}]
  %s8 = sld [smem:[#allocation0]]
  $region77: #{tpu_custom_call.1} parent=0
    _
  %s10 = ssub.s32 1, %s8
  %s11 = scalar_select 0, %s10, %s8
  $region1: #{tpu_custom_call.1} parent=0
    #allocation2 [shape = 'u8[106496]{0}', space=vmem, size = 0x1a000, scoped, tag = 'input window, operand 0']
    #allocation3 [shape = 's32[2]{0}', space=sflag, size = 0x8, scoped, tag = 'scoped memory for tpu_custom_call.1']
    #allocation4 [shape = 's32[2]{0}', space=sflag, size = 0x8, scoped, tag = 'scoped memory for tpu_custom_call.1']
    #allocation5 [shape = 'u8[32768]{0}', space=vmem, size = 0x8000, scoped, tag = 'input window, operand 1, single buffered']
    #allocation6 [shape = 's32[1]{0}', space=sflag, size = 0x4, scoped, tag = 'scoped memory for tpu_custom_call.1']
    #allocation7 [shape = 'u8[32768]{0}', space=vmem, size = 0x8000, scoped, tag = 'input window, operand 3, single buffered']
    #allocation8 [shape = 'u8[32768]{0}', space=vmem, size = 0x8000, scoped, tag = 'input window, operand 5, single buffered']
    #allocation9 [shape = 's32[1]{0}', space=sflag, size = 0x4, scoped, tag = 'scoped memory for tpu_custom_call.1']
    #allocation10 [shape = 'u8[53248]{0}', space=vmem, size = 0xd000, scoped, tag = 'output window, operand 0']
    %12 = vsyncpa [#allocation3], 0
    %s13 = scalar_lea.sflag [#allocation3], 1
    %14 = vsyncpa %s13, 0
    %15 = vsyncpa [#allocation6], 0
    %16 = vsyncpa [#allocation9], 0
    %17 = vsyncpa [#allocation4], 0
    %s18 = scalar_lea.sflag [#allocation4], 1
    %19 = vsyncpa %s18, 0
    loop: start=0, step=1, limit=4
    $region2: #{tpu_custom_call.1} parent=1 // loop_pre_header
      _
    $region3: #{tpu_custom_call.1} parent=1 // loop_header
      %s21 = sphi 0, %s25
      %p22 = scmp.ge.s32.totalorder %s21, 4
      %s31 = sphi 0, %s33
      %s34 = sphi 0, %s31
      %s35 = sphi 0, %s34
      %s51 = sphi 0, %s35
      %s55 = sphi 0, %s55
      %s57 = sphi 0, %s55
      %s58 = sphi 0, %s57
      %s72 = sphi 0, %s58
      %s76 = sphi 0, %s76
      %s78 = sphi 0, %s76
      %s79 = sphi 0, %s78
      %s93 = sphi 0, %s79
      %s97 = sphi 0, %s97
      %s99 = sphi 0, %s97
      %s100 = sphi 0, %s99
      %s114 = sphi 0, %s100
      %s118 = sphi 0, %s118
      %s120 = sphi 0, %s118
      %s121 = sphi 0, %s120
      %s135 = sphi 0, %s121
      %s139 = sphi 0, %s139
      %s141 = sphi 0, %s139
      %s142 = sphi 0, %s141
      %s156 = sphi 0, %s142
      %s160 = sphi 0, %s160
      %s162 = sphi 0, %s160
      %s163 = sphi 0, %s162
      %s177 = sphi 0, %s163
      %s183 = sphi 0, %s185
      %s186 = sphi 0, %s183
      %s187 = sphi 0, %s186
      %s203 = sphi 0, %s187
    $region4: #{tpu_custom_call.1} parent=1 // loop_header_branch
      %24 = sbr.rel (%p22) target = $region8
    $region5: #{tpu_custom_call.1} parent=1 // loop_body
      %s26 = ssub.s32 %s21, 1
      %s27 = ssub.s32 %s21, 2
      %s28 = sadd.s32 %s21, 1
      %s29 = ssub.s32 %s21, %s28
      %p30 = scmp.eq.s32.totalorder %s29, 0
      %s32 = sadd.s32 %s31, 1
      %s33 = scalar_select %p30, %s31, %s32
      %p36 = pneg %p30
      %p37 = scmp.eq.s32.totalorder %s21, 1
      %p38 = por %p36, %p37
      %p39 = scmp.ne.s32.totalorder %s31, %s34
      %p40 = scmp.eq.s32.totalorder %s21, 0
      %p41 = por %p39, %p40
      %p42 = scmp.ne.s32.totalorder %s31, %s34
      %p43 = scmp.eq.s32.totalorder %s26, 1
      %p44 = por %p42, %p43
      %p45 = scmp.ne.s32.totalorder %s34, %s35
      %p46 = scmp.eq.s32.totalorder %s26, 0
      %p47 = por %p45, %p46
      %p48 = scmp.ne.s32.totalorder %s34, %s35
      %p49 = scmp.eq.s32.totalorder %s27, 1
      %p50 = por %p48, %p49
      %p52 = scmp.ne.s32.totalorder %s35, %s51
      %p53 = scmp.eq.s32.totalorder %s27, 0
      %p54 = por %p52, %p53
      %s56 = sadd.s32 %s55, 1
      %p59 = scmp.eq.s32.totalorder %s21, 1
      %p60 = scmp.ne.s32.totalorder %s55, %s57
      %p61 = scmp.eq.s32.totalorder %s21, 0
      %p62 = por %p60, %p61
      %p63 = scmp.ne.s32.totalorder %s55, %s57
      %p64 = scmp.eq.s32.totalorder %s26, 1
      %p65 = por %p63, %p64
      %p66 = scmp.ne.s32.totalorder %s57, %s58
      %p67 = scmp.eq.s32.totalorder %s26, 0
      %p68 = por %p66, %p67
      %p69 = scmp.ne.s32.totalorder %s57, %s58
      %p70 = scmp.eq.s32.totalorder %s27, 1
      %p71 = por %p69, %p70
      %p73 = scmp.ne.s32.totalorder %s58, %s72
      %p74 = scmp.eq.s32.totalorder %s27, 0
      %p75 = por %p73, %p74
      %s77 = sadd.s32 %s76, 1
      %p80 = scmp.eq.s32.totalorder %s21, 1
      %p81 = scmp.ne.s32.totalorder %s76, %s78
      %p82 = scmp.eq.s32.totalorder %s21, 0
      %p83 = por %p81, %p82
      %p84 = scmp.ne.s32.totalorder %s76, %s78
      %p85 = scmp.eq.s32.totalorder %s26, 1
      %p86 = por %p84, %p85
      %p87 = scmp.ne.s32.totalorder %s78, %s79
      %p88 = scmp.eq.s32.totalorder %s26, 0
      %p89 = por %p87, %p88
      %p90 = scmp.ne.s32.totalorder %s78, %s79
      %p91 = scmp.eq.s32.totalorder %s27, 1
      %p92 = por %p90, %p91
      %p94 = scmp.ne.s32.totalorder %s79, %s93
      %p95 = scmp.eq.s32.totalorder %s27, 0
      %p96 = por %p94, %p95
      %s98 = sadd.s32 %s97, 1
      %p101 = scmp.eq.s32.totalorder %s21, 1
      %p102 = scmp.ne.s32.totalorder %s97, %s99
      %p103 = scmp.eq.s32.totalorder %s21, 0
      %p104 = por %p102, %p103
      %p105 = scmp.ne.s32.totalorder %s97, %s99
      %p106 = scmp.eq.s32.totalorder %s26, 1
      %p107 = por %p105, %p106
      %p108 = scmp.ne.s32.totalorder %s99, %s100
      %p109 = scmp.eq.s32.totalorder %s26, 0
      %p110 = por %p108, %p109
      %p111 = scmp.ne.s32.totalorder %s99, %s100
      %p112 = scmp.eq.s32.totalorder %s27, 1
      %p113 = por %p111, %p112
      %p115 = scmp.ne.s32.totalorder %s100, %s114
      %p116 = scmp.eq.s32.totalorder %s27, 0
      %p117 = por %p115, %p116
      %s119 = sadd.s32 %s118, 1
      %p122 = scmp.eq.s32.totalorder %s21, 1
      %p123 = scmp.ne.s32.totalorder %s118, %s120
      %p124 = scmp.eq.s32.totalorder %s21, 0
      %p125 = por %p123, %p124
      %p126 = scmp.ne.s32.totalorder %s118, %s120
      %p127 = scmp.eq.s32.totalorder %s26, 1
      %p128 = por %p126, %p127
      %p129 = scmp.ne.s32.totalorder %s120, %s121
      %p130 = scmp.eq.s32.totalorder %s26, 0
      %p131 = por %p129, %p130
      %p132 = scmp.ne.s32.totalorder %s120, %s121
      %p133 = scmp.eq.s32.totalorder %s27, 1
      %p134 = por %p132, %p133
      %p136 = scmp.ne.s32.totalorder %s121, %s135
      %p137 = scmp.eq.s32.totalorder %s27, 0
      %p138 = por %p136, %p137
      %s140 = sadd.s32 %s139, 1
      %p143 = scmp.eq.s32.totalorder %s21, 1
      %p144 = scmp.ne.s32.totalorder %s139, %s141
      %p145 = scmp.eq.s32.totalorder %s21, 0
      %p146 = por %p144, %p145
      %p147 = scmp.ne.s32.totalorder %s139, %s141
      %p148 = scmp.eq.s32.totalorder %s26, 1
      %p149 = por %p147, %p148
      %p150 = scmp.ne.s32.totalorder %s141, %s142
      %p151 = scmp.eq.s32.totalorder %s26, 0
      %p152 = por %p150, %p151
      %p153 = scmp.ne.s32.totalorder %s141, %s142
      %p154 = scmp.eq.s32.totalorder %s27, 1
      %p155 = por %p153, %p154
      %p157 = scmp.ne.s32.totalorder %s142, %s156
      %p158 = scmp.eq.s32.totalorder %s27, 0
      %p159 = por %p157, %p158
      %s161 = sadd.s32 %s160, 1
      %p164 = scmp.eq.s32.totalorder %s21, 1
      %p165 = scmp.ne.s32.totalorder %s160, %s162
      %p166 = scmp.eq.s32.totalorder %s21, 0
      %p167 = por %p165, %p166
      %p168 = scmp.ne.s32.totalorder %s160, %s162
      %p169 = scmp.eq.s32.totalorder %s26, 1
      %p170 = por %p168, %p169
      %p171 = scmp.ne.s32.totalorder %s162, %s163
      %p172 = scmp.eq.s32.totalorder %s26, 0
      %p173 = por %p171, %p172
      %p174 = scmp.ne.s32.totalorder %s162, %s163
      %p175 = scmp.eq.s32.totalorder %s27, 1
      %p176 = por %p174, %p175
      %p178 = scmp.ne.s32.totalorder %s163, %s177
      %p179 = scmp.eq.s32.totalorder %s27, 0
      %p180 = por %p178, %p179
      %s181 = ssub.s32 %s21, %s28
      %p182 = scmp.eq.s32.totalorder %s181, 0
      %s184 = sadd.s32 %s183, 1
      %s185 = scalar_select %p182, %s183, %s184
      %p188 = pneg %p182
      %p189 = scmp.eq.s32.totalorder %s21, 1
      %p190 = por %p188, %p189
      %p191 = scmp.ne.s32.totalorder %s183, %s186
      %p192 = scmp.eq.s32.totalorder %s21, 0
      %p193 = por %p191, %p192
      %p194 = scmp.ne.s32.totalorder %s183, %s186
      %p195 = scmp.eq.s32.totalorder %s26, 1
      %p196 = por %p194, %p195
      %p197 = scmp.ne.s32.totalorder %s186, %s187
      %p198 = scmp.eq.s32.totalorder %s26, 0
      %p199 = por %p197, %p198
      %p200 = scmp.ne.s32.totalorder %s186, %s187
      %p201 = scmp.eq.s32.totalorder %s27, 1
      %p202 = por %p200, %p201
      %p204 = scmp.ne.s32.totalorder %s187, %s203
      %p205 = scmp.eq.s32.totalorder %s27, 0
      %p206 = por %p204, %p205
      %p207 = scmp.le.s32.totalorder 1, %s21
      %p208 = scmp.lt.s32.totalorder %s21, 3
      %p209 = pnand %p207, %p208
      %p210 = pneg %p209
      // Predicated region
      $region9: #{tpu_custom_call.1} parent=5 // pred_check
        _
      $region10: #{tpu_custom_call.1} parent=5 // pred_check_branch
        %212 = sbr.rel (%p209) target = $region12
      $region11: #{tpu_custom_call.1} parent=5 // pred_region
        %s213 = ssub.s32 %s21, 1
        // Predicated region
        $region13: #{tpu_custom_call.1} parent=11 // pred_check
          %p214 = pneg %p68
        $region14: #{tpu_custom_call.1} parent=11 // pred_check_branch
          %216 = sbr.rel (%p214) target = $region16
        $region15: #{tpu_custom_call.1} parent=11 // pred_region
          %s218 = ssub.s32 1024, 1024
          %219 = vsyncadd [#allocation6], %s218
          %s220 = sshll.u32 [#allocation5], 4
          %s221 = int_to_ptr.vmem [resolvable:$true] %s220
          %226 = dma.hbm_to_vmem [thread:$0]  %s1, 1024, %s221, [#allocation6], 64, 64, 4
        $region16: #{tpu_custom_call.1} parent=11 // pred_fallthru
          _
        // Predicated region
        $region17: #{tpu_custom_call.1} parent=11 // pred_check
          %p227 = pneg %p89
        $region18: #{tpu_custom_call.1} parent=11 // pred_check_branch
          %229 = sbr.rel (%p227) target = $region20
        $region19: #{tpu_custom_call.1} parent=11 // pred_region
          _
        $region20: #{tpu_custom_call.1} parent=11 // pred_fallthru
          _
        // Predicated region
        $region21: #{tpu_custom_call.1} parent=11 // pred_check
          %p230 = pneg %p110
        $region22: #{tpu_custom_call.1} parent=11 // pred_check_branch
          %232 = sbr.rel (%p230) target = $region24
        $region23: #{tpu_custom_call.1} parent=11 // pred_region
          %s234 = ssub.s32 1024, 1024
          %235 = vsyncadd [#allocation6], %s234
          %s236 = sshll.u32 [#allocation7], 4
          %s237 = int_to_ptr.vmem [resolvable:$true] %s236
          %242 = dma.hbm_to_vmem [thread:$0]  %s3, 1024, %s237, [#allocation6], 64, 64, 4
        $region24: #{tpu_custom_call.1} parent=11 // pred_fallthru
          _
        // Predicated region
        $region25: #{tpu_custom_call.1} parent=11 // pred_check
          %p243 = pneg %p131
        $region26: #{tpu_custom_call.1} parent=11 // pred_check_branch
          %245 = sbr.rel (%p243) target = $region28
        $region27: #{tpu_custom_call.1} parent=11 // pred_region
          _
        $region28: #{tpu_custom_call.1} parent=11 // pred_fallthru
          _
        // Predicated region
        $region29: #{tpu_custom_call.1} parent=11 // pred_check
          %p246 = pneg %p152
        $region30: #{tpu_custom_call.1} parent=11 // pred_check_branch
          %248 = sbr.rel (%p246) target = $region32
        $region31: #{tpu_custom_call.1} parent=11 // pred_region
          %s250 = ssub.s32 1024, 1024
          %251 = vsyncadd [#allocation9], %s250
          %s252 = sshll.u32 [#allocation8], 4
          %s253 = int_to_ptr.vmem [resolvable:$true] %s252
          %258 = dma.hbm_to_vmem [thread:$0]  %s5, 1024, %s253, [#allocation9], 64, 64, 4
        $region32: #{tpu_custom_call.1} parent=11 // pred_fallthru
          _
        // Predicated region
        $region33: #{tpu_custom_call.1} parent=11 // pred_check
          %p259 = pneg %p173
        $region34: #{tpu_custom_call.1} parent=11 // pred_check_branch
          %261 = sbr.rel (%p259) target = $region36
        $region35: #{tpu_custom_call.1} parent=11 // pred_region
          _
        $region36: #{tpu_custom_call.1} parent=11 // pred_fallthru
          _
      $region12: #{tpu_custom_call.1} parent=5 // pred_fallthru
        _
      %p262 = scmp.lt.s32.totalorder %s21, 2
      // Predicated region
      $region37: #{tpu_custom_call.1} parent=5 // pred_check
        %p263 = pneg %p262
      $region38: #{tpu_custom_call.1} parent=5 // pred_check_branch
        %265 = sbr.rel (%p263) target = $region40
      $region39: #{tpu_custom_call.1} parent=5 // pred_region
        // Predicated region
        $region41: #{tpu_custom_call.1} parent=39 // pred_check
          %p266 = pneg %p41
        $region42: #{tpu_custom_call.1} parent=39 // pred_check_branch
          %268 = sbr.rel (%p266) target = $region44
        $region43: #{tpu_custom_call.1} parent=39 // pred_region
          %s269 = sand.u32 %s31, 1
          %s270 = scalar_lea.sflag [#allocation3], %s269
          %s271 = sand.u32 %s31, 1
          %s272 = smul.addr %s271, 104
          %s273 = scalar_lea.vmem [#allocation2], %s272
          %s274 = smul.u32 13, %s21
          %s276 = ssub.s32 1664, 1664
          %277 = vsyncadd %s270, %s276
          %s278 = smul.addr %s274, 128
          %s279 = scalar_lea.hbm %s0, %s278
          %s280 = sshll.u32 %s273, 4
          %s281 = int_to_ptr.vmem [resolvable:$true] %s280
          %286 = dma.hbm_to_vmem [thread:$0]  %s279, 1664, %s281, %s270, 128, 128, 8
        $region44: #{tpu_custom_call.1} parent=39 // pred_fallthru
          _
      $region40: #{tpu_custom_call.1} parent=5 // pred_fallthru
        _
      %p287 = scmp.le.s32.totalorder 1, %s21
      %p288 = scmp.lt.s32.totalorder %s21, 3
      %p289 = pnand %p287, %p288
      %p290 = pneg %p289
      // Predicated region
      $region45: #{tpu_custom_call.1} parent=5 // pred_check
        _
      $region46: #{tpu_custom_call.1} parent=5 // pred_check_branch
        %292 = sbr.rel (%p289) target = $region48
      $region47: #{tpu_custom_call.1} parent=5 // pred_region
        %s293 = ssub.s32 %s21, 1
        %s294 = sand.u32 %s34, 1
        %s295 = scalar_lea.sflag [#allocation3], %s294
        %s296 = sand.u32 %s34, 1
        %s297 = smul.addr %s296, 104
        %s298 = scalar_lea.vmem [#allocation2], %s297
        // Predicated region
        $region49: #{tpu_custom_call.1} parent=47 // pred_check
          %p299 = pneg %p47
        $region50: #{tpu_custom_call.1} parent=47 // pred_check_branch
          %301 = sbr.rel (%p299) target = $region52
        $region51: #{tpu_custom_call.1} parent=47 // pred_region
          %302 = dma.done %s295, 1664
        $region52: #{tpu_custom_call.1} parent=47 // pred_fallthru
          _
        // Predicated region
        $region53: #{tpu_custom_call.1} parent=47 // pred_check
          %p303 = pneg %p68
        $region54: #{tpu_custom_call.1} parent=47 // pred_check_branch
          %305 = sbr.rel (%p303) target = $region56
        $region55: #{tpu_custom_call.1} parent=47 // pred_region
          %306 = dma.done [#allocation6], 1024
        $region56: #{tpu_custom_call.1} parent=47 // pred_fallthru
          _
        // Predicated region
        $region57: #{tpu_custom_call.1} parent=47 // pred_check
          %p307 = pneg %p110
        $region58: #{tpu_custom_call.1} parent=47 // pred_check_branch
          %309 = sbr.rel (%p307) target = $region60
        $region59: #{tpu_custom_call.1} parent=47 // pred_region
          %310 = dma.done [#allocation6], 1024
        $region60: #{tpu_custom_call.1} parent=47 // pred_fallthru
          _
        // Predicated region
        $region61: #{tpu_custom_call.1} parent=47 // pred_check
          %p311 = pneg %p152
        $region62: #{tpu_custom_call.1} parent=47 // pred_check_branch
          %313 = sbr.rel (%p311) target = $region64
        $region63: #{tpu_custom_call.1} parent=47 // pred_region
          %314 = dma.done [#allocation9], 1024
        $region64: #{tpu_custom_call.1} parent=47 // pred_fallthru
          _
        %s315 = sand.u32 %s34, 1
        %s316 = scalar_lea.sflag [#allocation3], %s315
        %s317 = sand.u32 %s34, 1
        %s318 = smul.addr %s317, 104
        %s319 = scalar_lea.vmem [#allocation2], %s318
        %p320 = pneg %p47
        %p321 = pneg %p44
        %p322 = pneg %p68
        %p323 = pneg %p65
        %p324 = pneg %p89
        %p325 = pneg %p86
        %p326 = pneg %p110
        %p327 = pneg %p107
        %p328 = pneg %p131
        %p329 = pneg %p128
        %p330 = pneg %p152
        %p331 = pneg %p149
        %p332 = pneg %p173
        %p333 = pneg %p170
        %p334 = pneg %p199
        %p335 = pneg %p196
        %s336 = sand.u32 %s186, 1
        %s337 = scalar_lea.sflag [#allocation4], %s336
        %s338 = sand.u32 %s186, 1
        %s339 = smul.addr %s338, 52
        %s340 = scalar_lea.vmem [#allocation10], %s339
        %s341 = smul.u32 13, %s26
        %s342 = smul.u32 13, %s26
        %v344 = vld [vmem:[%s298] sm:$0xff]
        %v345 = vld [vmem:[%s298 + $0x8] sm:$0xff]
        %v346 = vld [vmem:[%s298 + $0x10] sm:$0xff]
        %v347 = vld [vmem:[%s298 + $0x18] sm:$0xff]
        %v348 = vld [vmem:[%s298 + $0x20] sm:$0xff]
        %v349 = vld [vmem:[%s298 + $0x28] sm:$0xff]
        %v350 = vld [vmem:[%s298 + $0x30] sm:$0xff]
        %v351 = vld [vmem:[%s298 + $0x38] sm:$0xff]
        %v352 = vld [vmem:[%s298 + $0x40] sm:$0xff]
        %v353 = vld [vmem:[%s298 + $0x48] sm:$0xff]
        %v354 = vld [vmem:[%s298 + $0x50] sm:$0xff]
        %v355 = vld [vmem:[%s298 + $0x58] sm:$0xff]
        %v356 = vld [vmem:[%s298 + $0x60] sm:$0xff]
        %v357 = vpack.c.bf16 %v345, %v344
        %v358 = vpack.c.bf16 %v347, %v346
        %v359 = vpack.c.bf16 %v349, %v348
        %v360 = vpack.c.bf16 %v351, %v350
        %v361 = vpack.c.bf16 %v353, %v352
        %v362 = vpack.c.bf16 %v355, %v354
        %v363 = vpack.c.bf16 %v356, %v356
        %v364 = vld [vmem:[#allocation5] sm:$0xf]
        %v365 = vld [vmem:[#allocation5 + $0x4] sm:$0xf]
        %v366 = vld [vmem:[#allocation5 + $0x8] sm:$0xf]
        %v367 = vld [vmem:[#allocation5 + $0xc] sm:$0xf]
        %v368 = vld [vmem:[#allocation5 + $0x10] sm:$0xf]
        %v369 = vld [vmem:[#allocation5 + $0x14] sm:$0xf]
        %v370 = vld [vmem:[#allocation5 + $0x18] sm:$0xf]
        %v371 = vld [vmem:[#allocation5 + $0x1c] sm:$0xf]
        %v372 = vld [vmem:[#allocation5 + $0x20] sm:$0xf]
        %v373 = vld [vmem:[#allocation5 + $0x24] sm:$0xf]
        %v374 = vld [vmem:[#allocation5 + $0x28] sm:$0xf]
        %v375 = vld [vmem:[#allocation5 + $0x2c] sm:$0xf]
        %v376 = vld [vmem:[#allocation5 + $0x30] sm:$0xf]
        %v377 = vld [vmem:[#allocation5 + $0x34] sm:$0xf]
        %v378 = vld [vmem:[#allocation5 + $0x38] sm:$0xf]
        %v379 = vld [vmem:[#allocation5 + $0x3c] sm:$0xf]
        %v380 = vld [vmem:[%s2] sm:$0x1]
        %v382 = vlaneseq
        %v383 = vshrl.u32 %v382, 7
        %v384 = vsub.s32 0, %v383
        %v385 = vrot.slane %v380, %v384
        %v403 = vunpack.c.l.b16 %v364
        %v404 = vunpack.c.l.b16 %v365
        %v405 = vunpack.c.l.b16 %v366
        %v406 = vunpack.c.l.b16 %v367
        %v407 = vunpack.c.l.b16 %v368
        %v408 = vunpack.c.l.b16 %v369
        %v409 = vunpack.c.l.b16 %v370
        %v410 = vunpack.c.l.b16 %v371
        %v411 = vunpack.c.l.b16 %v372
        %v412 = vunpack.c.l.b16 %v373
        %v413 = vunpack.c.l.b16 %v374
        %v414 = vunpack.c.l.b16 %v375
        %v415 = vunpack.c.l.b16 %v376
        %v416 = vunpack.c.l.b16 %v377
        %v417 = vunpack.c.l.b16 %v378
        %v418 = vunpack.c.l.b16 %v379
        %v419 = vpack.c.b16 %v404, %v403
        %v420 = vpack.c.b16 %v406, %v405
        %v421 = vpack.c.b16 %v408, %v407
        %v422 = vpack.c.b16 %v410, %v409
        %v423 = vpack.c.b16 %v412, %v411
        %v424 = vpack.c.b16 %v414, %v413
        %v425 = vpack.c.b16 %v416, %v415
        %v426 = vpack.c.b16 %v418, %v417
        %435 = vmatprep.subr.bf16.mxu0 0
        %436 = vmatpush1.bf16.msra.mxu0 %v419
        %437 = vmatprep.subr.bf16.mxu0 0
        %438 = vmatpush1.bf16.msra.mxu0 %v420
        %439 = vmatprep.subr.bf16.mxu0 0
        %440 = vmatpush1.bf16.msra.mxu0 %v421
        %441 = vmatprep.subr.bf16.mxu0 0
        %442 = vmatpush1.bf16.msra.mxu0 %v422
        %443 = vmatprep.subr.bf16.mxu0 0
        %444 = vmatpush1.bf16.msra.mxu0 %v423
        %445 = vmatprep.subr.bf16.mxu0 0
        %446 = vmatpush1.bf16.msra.mxu0 %v424
        %447 = vmatprep.subr.bf16.mxu0 0
        %448 = vmatpush1.bf16.msra.mxu0 %v425
        %449 = vmatprep.subr.bf16.mxu0 0
        %450 = vmatpush1.bf16.msra.mxu0 %v426
        %451 = vmatprep.subr.bf16.mxu0 0
        %452 = vmatpush1.bf16.msra.mxu0 0
        %453 = vmatprep.subr.bf16.mxu0 0
        %454 = vmatpush1.bf16.msra.mxu0 0
        %455 = vmatprep.subr.bf16.mxu0 0
        %456 = vmatpush1.bf16.msra.mxu0 0
        %457 = vmatprep.subr.bf16.mxu0 0
        %458 = vmatpush1.bf16.msra.mxu0 0
        %459 = vmatprep.subr.bf16.mxu0 0
        %460 = vmatpush1.bf16.msra.mxu0 0
        %461 = vmatprep.subr.bf16.mxu0 0
        %462 = vmatpush1.bf16.msra.mxu0 0
        %463 = vmatprep.subr.bf16.mxu0 0
        %464 = vmatpush1.bf16.msra.mxu0 0
        %465 = vmatprep.subr.bf16.mxu0 0
        %466 = vmatpush1.bf16.msra.mxu0 0
        %467 = vmatprep.mubr.bf16.mxu0 0
        %468 = vmatmul.mubr.bf16.gmra.mrb[0].mxu0 %v357
        %v469 = vpop.f32.mrb[0].mxu0
        %v470 = vadd.f32 %v385, %v469
        %v471 = vpop.f32.mrb[0].mxu0
        %v472 = vpop.f32.mrb[0].mxu0
        %v473 = vadd.f32 %v385, %v472
        %v474 = vpop.f32.mrb[0].mxu0
        %475 = vmatprep.mubr.bf16.mxu0 0
        %476 = vmatmul.mubr.bf16.gmra.mrb[0].mxu0 %v358
        %v477 = vpop.f32.mrb[0].mxu0
        %v478 = vadd.f32 %v385, %v477
        %v479 = vpop.f32.mrb[0].mxu0
        %v480 = vpop.f32.mrb[0].mxu0
        %v481 = vadd.f32 %v385, %v480
        %v482 = vpop.f32.mrb[0].mxu0
        %483 = vmatprep.mubr.bf16.mxu0 0
        %484 = vmatmul.mubr.bf16.gmra.mrb[0].mxu0 %v359
        %v485 = vpop.f32.mrb[0].mxu0
        %v486 = vadd.f32 %v385, %v485
        %v487 = vpop.f32.mrb[0].mxu0
        %v488 = vpop.f32.mrb[0].mxu0
        %v489 = vadd.f32 %v385, %v488
        %v490 = vpop.f32.mrb[0].mxu0
        %491 = vmatprep.mubr.bf16.mxu0 0
        %492 = vmatmul.mubr.bf16.gmra.mrb[0].mxu0 %v360
        %v493 = vpop.f32.mrb[0].mxu0
        %v494 = vadd.f32 %v385, %v493
        %v495 = vpop.f32.mrb[0].mxu0
        %v496 = vpop.f32.mrb[0].mxu0
        %v497 = vadd.f32 %v385, %v496
        %v498 = vpop.f32.mrb[0].mxu0
        %499 = vmatprep.mubr.bf16.mxu0 0
        %500 = vmatmul.mubr.bf16.gmra.mrb[0].mxu0 %v361
        %v501 = vpop.f32.mrb[0].mxu0
        %v502 = vadd.f32 %v385, %v501
        %v503 = vpop.f32.mrb[0].mxu0
        %v504 = vpop.f32.mrb[0].mxu0
        %v505 = vadd.f32 %v385, %v504
        %v506 = vpop.f32.mrb[0].mxu0
        %507 = vmatprep.mubr.bf16.mxu0 0
        %508 = vmatmul.mubr.bf16.gmra.mrb[0].mxu0 %v362
        %v509 = vpop.f32.mrb[0].mxu0
        %v510 = vadd.f32 %v385, %v509
        %v511 = vpop.f32.mrb[0].mxu0
        %v512 = vpop.f32.mrb[0].mxu0
        %v513 = vadd.f32 %v385, %v512
        %v514 = vpop.f32.mrb[0].mxu0
        %515 = vmatprep.mubr.bf16.mxu0 0
        %516 = vmatmul.mubr.bf16.gmra.mrb[0].mxu0 %v363
        %v517 = vpop.f32.mrb[0].mxu0
        %v518 = vadd.f32 %v385, %v517
        %v519 = vpop.f32.mrb[0].mxu0
        %v520 = vpop.f32.mrb[0].mxu0
        %v521 = vpop.f32.mrb[0].mxu0
        %522 = vdwg.mxu0
        %v523 = vmax.f32 %v470, 0.0
        %v524 = vmax.f32 %v473, 0.0
        %v525 = vmax.f32 %v478, 0.0
        %v526 = vmax.f32 %v481, 0.0
        %v527 = vmax.f32 %v486, 0.0
        %v528 = vmax.f32 %v489, 0.0
        %v529 = vmax.f32 %v494, 0.0
        %v530 = vmax.f32 %v497, 0.0
        %v531 = vmax.f32 %v502, 0.0
        %v532 = vmax.f32 %v505, 0.0
        %v533 = vmax.f32 %v510, 0.0
        %v534 = vmax.f32 %v513, 0.0
        %v535 = vmax.f32 %v518, 0.0
        %v536 = vpack.c.bf16 %v524, %v523
        %v537 = vpack.c.bf16 %v526, %v525
        %v538 = vpack.c.bf16 %v528, %v527
        %v539 = vpack.c.bf16 %v530, %v529
        %v540 = vpack.c.bf16 %v532, %v531
        %v541 = vpack.c.bf16 %v534, %v533
        %v542 = vpack.c.bf16 %v535, %v535
        %v543 = vld [vmem:[#allocation7] sm:$0xf]
        %v544 = vld [vmem:[#allocation7 + $0x4] sm:$0xf]
        %v545 = vld [vmem:[#allocation7 + $0x8] sm:$0xf]
        %v546 = vld [vmem:[#allocation7 + $0xc] sm:$0xf]
        %v547 = vld [vmem:[#allocation7 + $0x10] sm:$0xf]
        %v548 = vld [vmem:[#allocation7 + $0x14] sm:$0xf]
        %v549 = vld [vmem:[#allocation7 + $0x18] sm:$0xf]
        %v550 = vld [vmem:[#allocation7 + $0x1c] sm:$0xf]
        %v551 = vld [vmem:[#allocation7 + $0x20] sm:$0xf]
        %v552 = vld [vmem:[#allocation7 + $0x24] sm:$0xf]
        %v553 = vld [vmem:[#allocation7 + $0x28] sm:$0xf]
        %v554 = vld [vmem:[#allocation7 + $0x2c] sm:$0xf]
        %v555 = vld [vmem:[#allocation7 + $0x30] sm:$0xf]
        %v556 = vld [vmem:[#allocation7 + $0x34] sm:$0xf]
        %v557 = vld [vmem:[#allocation7 + $0x38] sm:$0xf]
        %v558 = vld [vmem:[#allocation7 + $0x3c] sm:$0xf]
        %v559 = vld [vmem:[%s4] sm:$0x1]
        %v561 = vlaneseq
        %v562 = vshrl.u32 %v561, 7
        %v563 = vsub.s32 0, %v562
        %v564 = vrot.slane %v559, %v563
        %v582 = vunpack.c.l.b16 %v543
        %v583 = vunpack.c.l.b16 %v544
        %v584 = vunpack.c.l.b16 %v545
        %v585 = vunpack.c.l.b16 %v546
        %v586 = vunpack.c.l.b16 %v547
        %v587 = vunpack.c.l.b16 %v548
        %v588 = vunpack.c.l.b16 %v549
        %v589 = vunpack.c.l.b16 %v550
        %v590 = vunpack.c.l.b16 %v551
        %v591 = vunpack.c.l.b16 %v552
        %v592 = vunpack.c.l.b16 %v553
        %v593 = vunpack.c.l.b16 %v554
        %v594 = vunpack.c.l.b16 %v555
        %v595 = vunpack.c.l.b16 %v556
        %v596 = vunpack.c.l.b16 %v557
        %v597 = vunpack.c.l.b16 %v558
        %v598 = vpack.c.b16 %v583, %v582
        %v599 = vpack.c.b16 %v585, %v584
        %v600 = vpack.c.b16 %v587, %v586
        %v601 = vpack.c.b16 %v589, %v588
        %v602 = vpack.c.b16 %v591, %v590
        %v603 = vpack.c.b16 %v593, %v592
        %v604 = vpack.c.b16 %v595, %v594
        %v605 = vpack.c.b16 %v597, %v596
        %614 = vmatprep.subr.bf16.mxu0 0
        %615 = vmatpush1.bf16.msra.mxu0 %v598
        %616 = vmatprep.subr.bf16.mxu0 0
        %617 = vmatpush1.bf16.msra.mxu0 %v599
        %618 = vmatprep.subr.bf16.mxu0 0
        %619 = vmatpush1.bf16.msra.mxu0 %v600
        %620 = vmatprep.subr.bf16.mxu0 0
        %621 = vmatpush1.bf16.msra.mxu0 %v601
        %622 = vmatprep.subr.bf16.mxu0 0
        %623 = vmatpush1.bf16.msra.mxu0 %v602
        %624 = vmatprep.subr.bf16.mxu0 0
        %625 = vmatpush1.bf16.msra.mxu0 %v603
        %626 = vmatprep.subr.bf16.mxu0 0
        %627 = vmatpush1.bf16.msra.mxu0 %v604
        %628 = vmatprep.subr.bf16.mxu0 0
        %629 = vmatpush1.bf16.msra.mxu0 %v605
        %630 = vmatprep.subr.bf16.mxu0 0
        %631 = vmatpush1.bf16.msra.mxu0 0
        %632 = vmatprep.subr.bf16.mxu0 0
        %633 = vmatpush1.bf16.msra.mxu0 0
        %634 = vmatprep.subr.bf16.mxu0 0
        %635 = vmatpush1.bf16.msra.mxu0 0
        %636 = vmatprep.subr.bf16.mxu0 0
        %637 = vmatpush1.bf16.msra.mxu0 0
        %638 = vmatprep.subr.bf16.mxu0 0
        %639 = vmatpush1.bf16.msra.mxu0 0
        %640 = vmatprep.subr.bf16.mxu0 0
        %641 = vmatpush1.bf16.msra.mxu0 0
        %642 = vmatprep.subr.bf16.mxu0 0
        %643 = vmatpush1.bf16.msra.mxu0 0
        %644 = vmatprep.subr.bf16.mxu0 0
        %645 = vmatpush1.bf16.msra.mxu0 0
        %646 = vmatprep.mubr.bf16.mxu0 0
        %647 = vmatmul.mubr.bf16.gmra.mrb[0].mxu0 %v536
        %v648 = vpop.f32.mrb[0].mxu0
        %v649 = vadd.f32 %v564, %v648
        %v650 = vpop.f32.mrb[0].mxu0
        %v651 = vpop.f32.mrb[0].mxu0
        %v652 = vadd.f32 %v564, %v651
        %v653 = vpop.f32.mrb[0].mxu0
        %654 = vmatprep.mubr.bf16.mxu0 0
        %655 = vmatmul.mubr.bf16.gmra.mrb[0].mxu0 %v537
        %v656 = vpop.f32.mrb[0].mxu0
        %v657 = vadd.f32 %v564, %v656
        %v658 = vpop.f32.mrb[0].mxu0
        %v659 = vpop.f32.mrb[0].mxu0
        %v660 = vadd.f32 %v564, %v659
        %v661 = vpop.f32.mrb[0].mxu0
        %662 = vmatprep.mubr.bf16.mxu0 0
        %663 = vmatmul.mubr.bf16.gmra.mrb[0].mxu0 %v538
        %v664 = vpop.f32.mrb[0].mxu0
        %v665 = vadd.f32 %v564, %v664
        %v666 = vpop.f32.mrb[0].mxu0
        %v667 = vpop.f32.mrb[0].mxu0
        %v668 = vadd.f32 %v564, %v667
        %v669 = vpop.f32.mrb[0].mxu0
        %670 = vmatprep.mubr.bf16.mxu0 0
        %671 = vmatmul.mubr.bf16.gmra.mrb[0].mxu0 %v539
        %v672 = vpop.f32.mrb[0].mxu0
        %v673 = vadd.f32 %v564, %v672
        %v674 = vpop.f32.mrb[0].mxu0
        %v675 = vpop.f32.mrb[0].mxu0
        %v676 = vadd.f32 %v564, %v675
        %v677 = vpop.f32.mrb[0].mxu0
        %678 = vmatprep.mubr.bf16.mxu0 0
        %679 = vmatmul.mubr.bf16.gmra.mrb[0].mxu0 %v540
        %v680 = vpop.f32.mrb[0].mxu0
        %v681 = vadd.f32 %v564, %v680
        %v682 = vpop.f32.mrb[0].mxu0
        %v683 = vpop.f32.mrb[0].mxu0
        %v684 = vadd.f32 %v564, %v683
        %v685 = vpop.f32.mrb[0].mxu0
        %686 = vmatprep.mubr.bf16.mxu0 0
        %687 = vmatmul.mubr.bf16.gmra.mrb[0].mxu0 %v541
        %v688 = vpop.f32.mrb[0].mxu0
        %v689 = vadd.f32 %v564, %v688
        %v690 = vpop.f32.mrb[0].mxu0
        %v691 = vpop.f32.mrb[0].mxu0
        %v692 = vadd.f32 %v564, %v691
        %v693 = vpop.f32.mrb[0].mxu0
        %694 = vmatprep.mubr.bf16.mxu0 0
        %695 = vmatmul.mubr.bf16.gmra.mrb[0].mxu0 %v542
        %v696 = vpop.f32.mrb[0].mxu0
        %v697 = vadd.f32 %v564, %v696
        %v698 = vpop.f32.mrb[0].mxu0
        %v699 = vpop.f32.mrb[0].mxu0
        %v700 = vpop.f32.mrb[0].mxu0
        %701 = vdwg.mxu0
        %v702 = vmax.f32 %v649, 0.0
        %v703 = vmax.f32 %v652, 0.0
        %v704 = vmax.f32 %v657, 0.0
        %v705 = vmax.f32 %v660, 0.0
        %v706 = vmax.f32 %v665, 0.0
        %v707 = vmax.f32 %v668, 0.0
        %v708 = vmax.f32 %v673, 0.0
        %v709 = vmax.f32 %v676, 0.0
        %v710 = vmax.f32 %v681, 0.0
        %v711 = vmax.f32 %v684, 0.0
        %v712 = vmax.f32 %v689, 0.0
        %v713 = vmax.f32 %v692, 0.0
        %v714 = vmax.f32 %v697, 0.0
        %v715 = vpack.c.bf16 %v703, %v702
        %v716 = vpack.c.bf16 %v705, %v704
        %v717 = vpack.c.bf16 %v707, %v706
        %v718 = vpack.c.bf16 %v709, %v708
        %v719 = vpack.c.bf16 %v711, %v710
        %v720 = vpack.c.bf16 %v713, %v712
        %v721 = vpack.c.bf16 %v714, %v714
        %v722 = vld [vmem:[#allocation8] sm:$0xf]
        %v723 = vld [vmem:[#allocation8 + $0x4] sm:$0xf]
        %v724 = vld [vmem:[#allocation8 + $0x8] sm:$0xf]
        %v725 = vld [vmem:[#allocation8 + $0xc] sm:$0xf]
        %v726 = vld [vmem:[#allocation8 + $0x10] sm:$0xf]
        %v727 = vld [vmem:[#allocation8 + $0x14] sm:$0xf]
        %v728 = vld [vmem:[#allocation8 + $0x18] sm:$0xf]
        %v729 = vld [vmem:[#allocation8 + $0x1c] sm:$0xf]
        %v730 = vld [vmem:[#allocation8 + $0x20] sm:$0xf]
        %v731 = vld [vmem:[#allocation8 + $0x24] sm:$0xf]
        %v732 = vld [vmem:[#allocation8 + $0x28] sm:$0xf]
        %v733 = vld [vmem:[#allocation8 + $0x2c] sm:$0xf]
        %v734 = vld [vmem:[#allocation8 + $0x30] sm:$0xf]
        %v735 = vld [vmem:[#allocation8 + $0x34] sm:$0xf]
        %v736 = vld [vmem:[#allocation8 + $0x38] sm:$0xf]
        %v737 = vld [vmem:[#allocation8 + $0x3c] sm:$0xf]
        %v738 = vld [vmem:[%s6] sm:$0x1]
        %v740 = vlaneseq
        %v741 = vshrl.u32 %v740, 7
        %v742 = vsub.s32 0, %v741
        %v743 = vrot.slane %v738, %v742
        %v761 = vunpack.c.l.b16 %v722
        %v762 = vunpack.c.l.b16 %v723
        %v763 = vunpack.c.l.b16 %v724
        %v764 = vunpack.c.l.b16 %v725
        %v765 = vunpack.c.l.b16 %v726
        %v766 = vunpack.c.l.b16 %v727
        %v767 = vunpack.c.l.b16 %v728
        %v768 = vunpack.c.l.b16 %v729
        %v769 = vunpack.c.l.b16 %v730
        %v770 = vunpack.c.l.b16 %v731
        %v771 = vunpack.c.l.b16 %v732
        %v772 = vunpack.c.l.b16 %v733
        %v773 = vunpack.c.l.b16 %v734
        %v774 = vunpack.c.l.b16 %v735
        %v775 = vunpack.c.l.b16 %v736
        %v776 = vunpack.c.l.b16 %v737
        %v777 = vpack.c.b16 %v762, %v761
        %v778 = vpack.c.b16 %v764, %v763
        %v779 = vpack.c.b16 %v766, %v765
        %v780 = vpack.c.b16 %v768, %v767
        %v781 = vpack.c.b16 %v770, %v769
        %v782 = vpack.c.b16 %v772, %v771
        %v783 = vpack.c.b16 %v774, %v773
        %v784 = vpack.c.b16 %v776, %v775
        %793 = vmatprep.subr.bf16.mxu0 0
        %794 = vmatpush1.bf16.msra.mxu0 %v777
        %795 = vmatprep.subr.bf16.mxu0 0
        %796 = vmatpush1.bf16.msra.mxu0 %v778
        %797 = vmatprep.subr.bf16.mxu0 0
        %798 = vmatpush1.bf16.msra.mxu0 %v779
        %799 = vmatprep.subr.bf16.mxu0 0
        %800 = vmatpush1.bf16.msra.mxu0 %v780
        %801 = vmatprep.subr.bf16.mxu0 0
        %802 = vmatpush1.bf16.msra.mxu0 %v781
        %803 = vmatprep.subr.bf16.mxu0 0
        %804 = vmatpush1.bf16.msra.mxu0 %v782
        %805 = vmatprep.subr.bf16.mxu0 0
        %806 = vmatpush1.bf16.msra.mxu0 %v783
        %807 = vmatprep.subr.bf16.mxu0 0
        %808 = vmatpush1.bf16.msra.mxu0 %v784
        %809 = vmatprep.subr.bf16.mxu0 0
        %810 = vmatpush1.bf16.msra.mxu0 0
        %811 = vmatprep.subr.bf16.mxu0 0
        %812 = vmatpush1.bf16.msra.mxu0 0
        %813 = vmatprep.subr.bf16.mxu0 0
        %814 = vmatpush1.bf16.msra.mxu0 0
        %815 = vmatprep.subr.bf16.mxu0 0
        %816 = vmatpush1.bf16.msra.mxu0 0
        %817 = vmatprep.subr.bf16.mxu0 0
        %818 = vmatpush1.bf16.msra.mxu0 0
        %819 = vmatprep.subr.bf16.mxu0 0
        %820 = vmatpush1.bf16.msra.mxu0 0
        %821 = vmatprep.subr.bf16.mxu0 0
        %822 = vmatpush1.bf16.msra.mxu0 0
        %823 = vmatprep.subr.bf16.mxu0 0
        %824 = vmatpush1.bf16.msra.mxu0 0
        %825 = vmatprep.mubr.bf16.mxu0 0
        %826 = vmatmul.mubr.bf16.gmra.mrb[0].mxu0 %v715
        %v827 = vpop.f32.mrb[0].mxu0
        %v828 = vadd.f32 %v743, %v827
        %v829 = vpop.f32.mrb[0].mxu0
        %v830 = vpop.f32.mrb[0].mxu0
        %v831 = vadd.f32 %v743, %v830
        %v832 = vpop.f32.mrb[0].mxu0
        %833 = vmatprep.mubr.bf16.mxu0 0
        %834 = vmatmul.mubr.bf16.gmra.mrb[0].mxu0 %v716
        %v835 = vpop.f32.mrb[0].mxu0
        %v836 = vadd.f32 %v743, %v835
        %v837 = vpop.f32.mrb[0].mxu0
        %v838 = vpop.f32.mrb[0].mxu0
        %v839 = vadd.f32 %v743, %v838
        %v840 = vpop.f32.mrb[0].mxu0
        %841 = vmatprep.mubr.bf16.mxu0 0
        %842 = vmatmul.mubr.bf16.gmra.mrb[0].mxu0 %v717
        %v843 = vpop.f32.mrb[0].mxu0
        %v844 = vadd.f32 %v743, %v843
        %v845 = vpop.f32.mrb[0].mxu0
        %v846 = vpop.f32.mrb[0].mxu0
        %v847 = vadd.f32 %v743, %v846
        %v848 = vpop.f32.mrb[0].mxu0
        %849 = vmatprep.mubr.bf16.mxu0 0
        %850 = vmatmul.mubr.bf16.gmra.mrb[0].mxu0 %v718
        %v851 = vpop.f32.mrb[0].mxu0
        %v852 = vadd.f32 %v743, %v851
        %v853 = vpop.f32.mrb[0].mxu0
        %v854 = vpop.f32.mrb[0].mxu0
        %v855 = vadd.f32 %v743, %v854
        %v856 = vpop.f32.mrb[0].mxu0
        %857 = vmatprep.mubr.bf16.mxu0 0
        %858 = vmatmul.mubr.bf16.gmra.mrb[0].mxu0 %v719
        %v859 = vpop.f32.mrb[0].mxu0
        %v860 = vadd.f32 %v743, %v859
        %v861 = vpop.f32.mrb[0].mxu0
        %v862 = vpop.f32.mrb[0].mxu0
        %v863 = vadd.f32 %v743, %v862
        %v864 = vpop.f32.mrb[0].mxu0
        %865 = vmatprep.mubr.bf16.mxu0 0
        %866 = vmatmul.mubr.bf16.gmra.mrb[0].mxu0 %v720
        %v867 = vpop.f32.mrb[0].mxu0
        %v868 = vadd.f32 %v743, %v867
        %v869 = vpop.f32.mrb[0].mxu0
        %v870 = vpop.f32.mrb[0].mxu0
        %v871 = vadd.f32 %v743, %v870
        %v872 = vpop.f32.mrb[0].mxu0
        %873 = vmatprep.mubr.bf16.mxu0 0
        %874 = vmatmul.mubr.bf16.gmra.mrb[0].mxu0 %v721
        %v875 = vpop.f32.mrb[0].mxu0
        %v876 = vadd.f32 %v743, %v875
        %v877 = vpop.f32.mrb[0].mxu0
        %v878 = vpop.f32.mrb[0].mxu0
        %v879 = vpop.f32.mrb[0].mxu0
        %880 = vdwg.mxu0
        %v881 = vpack.c.bf16 %v831, %v828
        %v882 = vpack.c.bf16 %v839, %v836
        %v883 = vpack.c.bf16 %v847, %v844
        %v884 = vpack.c.bf16 %v855, %v852
        %v885 = vpack.c.bf16 %v863, %v860
        %v886 = vpack.c.bf16 %v871, %v868
        %v887 = vpack.c.bf16 %v876, %v876
        %v895 = vunpack.c.l.b16 %v881
        %v896 = vunpack.c.h.b16 %v881
        %v897 = vunpack.c.l.b16 %v882
        %v898 = vunpack.c.h.b16 %v882
        %v899 = vunpack.c.l.b16 %v883
        %v900 = vunpack.c.h.b16 %v883
        %v901 = vunpack.c.l.b16 %v884
        %v902 = vunpack.c.h.b16 %v884
        %v903 = vunpack.c.l.b16 %v885
        %v904 = vunpack.c.h.b16 %v885
        %v905 = vunpack.c.l.b16 %v886
        %v906 = vunpack.c.h.b16 %v886
        %v907 = vunpack.c.l.b16 %v887
        %v908 = vpack.c.b16 %v895, %v895
        %v909 = vpack.c.b16 %v896, %v896
        %v910 = vpack.c.b16 %v897, %v897
        %v911 = vpack.c.b16 %v898, %v898
        %v912 = vpack.c.b16 %v899, %v899
        %v913 = vpack.c.b16 %v900, %v900
        %v914 = vpack.c.b16 %v901, %v901
        %v915 = vpack.c.b16 %v902, %v902
        %v916 = vpack.c.b16 %v903, %v903
        %v917 = vpack.c.b16 %v904, %v904
        %v918 = vpack.c.b16 %v905, %v905
        %v919 = vpack.c.b16 %v906, %v906
        %v920 = vpack.c.b16 %v907, %v907
        %934 = vst [vmem:[%s340] sm:$0xf] %v908
        %935 = vst [vmem:[%s340 + $0x4] sm:$0xf] %v909
        %936 = vst [vmem:[%s340 + $0x8] sm:$0xf] %v910
        %937 = vst [vmem:[%s340 + $0xc] sm:$0xf] %v911
        %938 = vst [vmem:[%s340 + $0x10] sm:$0xf] %v912
        %939 = vst [vmem:[%s340 + $0x14] sm:$0xf] %v913
        %940 = vst [vmem:[%s340 + $0x18] sm:$0xf] %v914
        %941 = vst [vmem:[%s340 + $0x1c] sm:$0xf] %v915
        %942 = vst [vmem:[%s340 + $0x20] sm:$0xf] %v916
        %943 = vst [vmem:[%s340 + $0x24] sm:$0xf] %v917
        %944 = vst [vmem:[%s340 + $0x28] sm:$0xf] %v918
        %945 = vst [vmem:[%s340 + $0x2c] sm:$0xf] %v919
        %946 = vst [vmem:[%s340 + $0x30] sm:$0xf] %v920
        %s947 = sand.u32 %s186, 1
        %s948 = scalar_lea.sflag [#allocation4], %s947
        %s949 = sand.u32 %s186, 1
        %s950 = smul.addr %s949, 52
        %s951 = scalar_lea.vmem [#allocation10], %s950
        // Predicated region
        $region65: #{tpu_custom_call.1} parent=47 // pred_check
          %p952 = pneg %p196
        $region66: #{tpu_custom_call.1} parent=47 // pred_check_branch
          %954 = sbr.rel (%p952) target = $region68
        $region67: #{tpu_custom_call.1} parent=47 // pred_region
          %s955 = smul.u32 13, %s26
          %s957 = ssub.s32 832, 832
          %958 = vsyncadd %s948, %s957
          %s959 = smul.addr %s955, 64
          %s960 = scalar_lea.hbm %s7, %s959
          %s961 = sshll.u32 %s951, 4
          %s962 = int_to_ptr.vmem [resolvable:$true] %s961
          %967 = dma.vmem_to_hbm [thread:$0]  %s962, 832, %s960, %s948, 64, 64, 4
        $region68: #{tpu_custom_call.1} parent=47 // pred_fallthru
          _
      $region48: #{tpu_custom_call.1} parent=5 // pred_fallthru
        _
      %p968 = scmp.le.s32.totalorder 2, %s21
      // Predicated region
      $region69: #{tpu_custom_call.1} parent=5 // pred_check
        %p969 = pneg %p968
      $region70: #{tpu_custom_call.1} parent=5 // pred_check_branch
        %971 = sbr.rel (%p969) target = $region72
      $region71: #{tpu_custom_call.1} parent=5 // pred_region
        %s972 = ssub.s32 %s21, 2
        // Predicated region
        $region73: #{tpu_custom_call.1} parent=71 // pred_check
          %p973 = pneg %p202
        $region74: #{tpu_custom_call.1} parent=71 // pred_check_branch
          %975 = sbr.rel (%p973) target = $region76
        $region75: #{tpu_custom_call.1} parent=71 // pred_region
          %s976 = sand.u32 %s187, 1
          %s977 = scalar_lea.sflag [#allocation4], %s976
          %s978 = sand.u32 %s187, 1
          %s979 = smul.addr %s978, 52
          %s980 = scalar_lea.vmem [#allocation10], %s979
          %981 = dma.done %s977, 832
        $region76: #{tpu_custom_call.1} parent=71 // pred_fallthru
          _
      $region72: #{tpu_custom_call.1} parent=5 // pred_fallthru
        _
    $region6: #{tpu_custom_call.1} parent=1 // loop_footer
      %s25 = sadd.s32 1, %s21
    $region7: #{tpu_custom_call.1} parent=1 // loop_footer_branch
      %20 = sbr.rel target = $region3
    $region8: #{tpu_custom_call.1} parent=1 // loop_exit
      _
    %982 = vsyncpa [#allocation3], 1
    %s983 = scalar_lea.sflag [#allocation3], 1
    %984 = vsyncpa %s983, 1
    %985 = vsyncpa [#allocation6], 1
    %986 = vsyncpa [#allocation9], 1
    %987 = vsyncpa [#allocation4], 1
    %s988 = scalar_lea.sflag [#allocation4], 1
    %989 = vsyncpa %s988, 1

</llo_original>
